<compile_context>
chip_gen: v7x
topology: tpu7x:2x2x1
jax: 0.10.0
libtpu: 0.0.40
codegen_flags: <defaults>
</compile_context>

<pallas_src>
import jax
import jax.numpy as jnp
from jax.experimental import pallas as pl
from jax.experimental.pallas import tpu as pltpu


def _model_kernel(x1_ref, x2_ref, o_ref):
    """x1_ref, x2_ref: (TB, D); o_ref: (TB, 6*D)."""
    d = x1_ref.shape[1]
    x1 = x1_ref[...]
    x2 = x2_ref[...]

    r1 = jnp.maximum(x1, 0)            # relu(x1)
    r2 = jnp.maximum(x2, 0)            # relu(x2)   (reused 3x below)
    r12 = jnp.maximum(x1 + x2, 0)      # relu(x1 + x2)

    o_ref[:, 0 * d:1 * d] = r1         # v7[:,   0:D ] = x1
    o_ref[:, 1 * d:2 * d] = r2         # v7[:,  D:2D ] = x2
    o_ref[:, 2 * d:3 * d] = r12        # v7[:, 2D:3D ] = x1 + x2
    o_ref[:, 3 * d:4 * d] = r2 + r2    # v7[:, 3D:4D ] = 2*x2 (relu(2x)=2*relu(x))
    o_ref[:, 4 * d:5 * d] = r2         # v7[:, 4D:5D ] = x2
    o_ref[:, 5 * d:6 * d] = r2         # v7[:, 5D:6D ] = x2


def model_forward(x1, x2):
    B, D = x1.shape
    assert x2.shape == (B, D), "forward requires matching shapes (see header)"
    dtype = jnp.result_type(x1.dtype, x2.dtype)
    x1 = x1.astype(dtype)
    x2 = x2.astype(dtype)
    itemsize = jnp.dtype(dtype).itemsize

    # Double-buffered per-step footprint = (2 inputs TB*D + 1 output TB*6D) * 2
    # = 16 * TB * D * itemsize.  Keep it <= ~12 MiB so it fits v5e's 16 MiB
    # scoped-VMEM default (and v6e/v7x 32 MiB) with headroom.  With the 2D
    # (TB, 6*D) output block this formula is layout-exact (no sublane padding).
    budget = 12 * 1024 * 1024
    tb_cap = max(16, (budget // (16 * D * itemsize)) // 16 * 16)

    # Small batches: one no-grid call with whole arrays resident in VMEM.
    # For B >= 256 prefer the grid path so v7x's two TCs both get work.
    if B < 256 and B <= tb_cap:
        out2d = pl.pallas_call(
            _model_kernel,
            out_shape=jax.ShapeDtypeStruct((B, 6 * D), dtype),
            in_specs=[
                pl.BlockSpec(memory_space=pltpu.MemorySpace.VMEM),
                pl.BlockSpec(memory_space=pltpu.MemorySpace.VMEM),
            ],
            out_specs=pl.BlockSpec(memory_space=pltpu.MemorySpace.VMEM),
        )(x1, x2)
        return out2d.reshape(-1)

    # Batch-tiled path.  TB grows toward the VMEM cap (amortizes ~0.35 us/step
    # grid overhead), rounded to a multiple of 16; at least 2 tiles so the
    # "parallel" batch axis can be sharded across v7x's 2 TensorCores.
    TB = min(tb_cap, 2048)
    half = ((B + 1) // 2 + 15) // 16 * 16
    TB = max(16, min(TB, half))
    nb = pl.cdiv(B, TB)

    out2d = pl.pallas_call(
        _model_kernel,
        out_shape=jax.ShapeDtypeStruct((B, 6 * D), dtype),
        grid=(nb,),
        in_specs=[
            pl.BlockSpec((TB, D), lambda i: (i, 0)),
            pl.BlockSpec((TB, D), lambda i: (i, 0)),
        ],
        out_specs=pl.BlockSpec((TB, 6 * D), lambda i: (i, 0)),
        compiler_params=pltpu.CompilerParams(
            dimension_semantics=("parallel",)),
    )(x1, x2)
    return out2d.reshape(-1)


def _reference(x1, x2):
    v3 = jnp.concatenate([x1, x2], axis=1)
    v4 = jnp.concatenate([x2, x2], axis=1)
    v5 = v3 + v4
    v6 = jnp.concatenate([v5, v4], axis=1)
    v7 = jnp.concatenate([v3, v6], axis=1)
    return jnp.maximum(v7, 0).reshape(-1)


if __name__ == "__main__":
    key = jax.random.PRNGKey(0)
    k1, k2, k3, k4 = jax.random.split(key, 4)

    # Small shapes consistent with the module (feature dims matched so every
    # cat/add in the forward is well-defined).
    B, D = 2, 16
    x1 = jax.random.normal(k1, (B, D), dtype=jnp.float32)
    x2 = jax.random.normal(k2, (B, D), dtype=jnp.float32)

    out = jax.block_until_ready(model_forward(x1, x2))
    ref = _reference(x1, x2)
    assert out.shape == (B * 6 * D,)
    assert jnp.allclose(out, ref, atol=1e-6, rtol=1e-6)

    # Also exercise the batch-tiled (grid) path with a ragged final block
    # (B % TB != 0) to validate Pallas OOB-write masking on the output.
    Bb, Db = 300, 128
    y1 = jax.random.normal(k3, (Bb, Db), dtype=jnp.float32)
    y2 = jax.random.normal(k4, (Bb, Db), dtype=jnp.float32)
    out2 = jax.block_until_ready(model_forward(y1, y2))
    ref2 = _reference(y1, y2)
    assert out2.shape == (Bb * 6 * Db,)
    assert jnp.allclose(out2, ref2, atol=1e-6, rtol=1e-6)

    # bf16 path (checks the multiple-of-16 tile rounding / packing assumptions).
    z1 = y1.astype(jnp.bfloat16)
    z2 = y2.astype(jnp.bfloat16)
    out3 = jax.block_until_ready(model_forward(z1, z2))
    ref3 = _reference(z1, z2)
    assert out3.dtype == jnp.bfloat16
    assert jnp.allclose(out3.astype(jnp.float32), ref3.astype(jnp.float32),
                        atol=2e-2, rtol=2e-2)

    print("KERNEL_OK")
</pallas_src>

<mosaic_0001>
module attributes {stable_mosaic.version = 11 : i64} {
  func.func @_model_kernel(%arg0: memref<2x16xf32, #tpu.memory_space<vmem>>, %arg1: memref<2x16xf32, #tpu.memory_space<vmem>>, %arg2: memref<2x96xf32, #tpu.memory_space<vmem>>) attributes {dimension_semantics = [], scalar_prefetch = 0 : i64, scratch_operands = 0 : i64, tpu.core_type = #tpu.core_type<tc>} {
    %c0 = arith.constant 0 : index
    %c0_0 = arith.constant 0 : index
    %0 = vector.load %arg0[%c0, %c0_0] : memref<2x16xf32, #tpu.memory_space<vmem>>, vector<2x16xf32>
    %c0_1 = arith.constant 0 : index
    %c0_2 = arith.constant 0 : index
    %1 = vector.load %arg1[%c0_1, %c0_2] : memref<2x16xf32, #tpu.memory_space<vmem>>, vector<2x16xf32>
    %cst = arith.constant 0.000000e+00 : f32
    %2 = vector.broadcast %cst : f32 to vector<2x16xf32>
    %3 = arith.maximumf %0, %2 : vector<2x16xf32>
    %cst_3 = arith.constant 0.000000e+00 : f32
    %4 = vector.broadcast %cst_3 : f32 to vector<2x16xf32>
    %5 = arith.maximumf %1, %4 : vector<2x16xf32>
    %6 = arith.addf %0, %1 : vector<2x16xf32>
    %cst_4 = arith.constant 0.000000e+00 : f32
    %7 = vector.broadcast %cst_4 : f32 to vector<2x16xf32>
    %8 = arith.maximumf %6, %7 : vector<2x16xf32>
    %c0_5 = arith.constant 0 : index
    %c0_6 = arith.constant 0 : index
    %9 = vector.load %arg2[%c0_5, %c0_6] : memref<2x96xf32, #tpu.memory_space<vmem>>, vector<2x16xf32>
    tpu.vector_store %arg2[%c0_5, %c0_6], %3 {strides = array<i32>} : memref<2x96xf32, #tpu.memory_space<vmem>>, vector<2x16xf32>,
    %c0_7 = arith.constant 0 : index
    %c16 = arith.constant 16 : index
    %10 = vector.load %arg2[%c0_7, %c16] : memref<2x96xf32, #tpu.memory_space<vmem>>, vector<2x16xf32>
    tpu.vector_store %arg2[%c0_7, %c16], %5 {strides = array<i32>} : memref<2x96xf32, #tpu.memory_space<vmem>>, vector<2x16xf32>,
    %c0_8 = arith.constant 0 : index
    %c32 = arith.constant 32 : index
    %11 = vector.load %arg2[%c0_8, %c32] : memref<2x96xf32, #tpu.memory_space<vmem>>, vector<2x16xf32>
    tpu.vector_store %arg2[%c0_8, %c32], %8 {strides = array<i32>} : memref<2x96xf32, #tpu.memory_space<vmem>>, vector<2x16xf32>,
    %12 = arith.addf %5, %5 : vector<2x16xf32>
    %c0_9 = arith.constant 0 : index
    %c48 = arith.constant 48 : index
    %13 = vector.load %arg2[%c0_9, %c48] : memref<2x96xf32, #tpu.memory_space<vmem>>, vector<2x16xf32>
    tpu.vector_store %arg2[%c0_9, %c48], %12 {strides = array<i32>} : memref<2x96xf32, #tpu.memory_space<vmem>>, vector<2x16xf32>,
    %c0_10 = arith.constant 0 : index
    %c64 = arith.constant 64 : index
    %14 = vector.load %arg2[%c0_10, %c64] : memref<2x96xf32, #tpu.memory_space<vmem>>, vector<2x16xf32>
    tpu.vector_store %arg2[%c0_10, %c64], %5 {strides = array<i32>} : memref<2x96xf32, #tpu.memory_space<vmem>>, vector<2x16xf32>,
    %c0_11 = arith.constant 0 : index
    %c80 = arith.constant 80 : index
    %15 = vector.load %arg2[%c0_11, %c80] : memref<2x96xf32, #tpu.memory_space<vmem>>, vector<2x16xf32>
    tpu.vector_store %arg2[%c0_11, %c80], %5 {strides = array<i32>} : memref<2x96xf32, #tpu.memory_space<vmem>>, vector<2x16xf32>,
    return
  }
}

</mosaic_0001>

<llo_original>
// kernel: tpu_custom_call.1
$region0: #{tpu_custom_call.1}
  #allocation0 [shape = 'u32[]', space=smem, size = 0x4, offset = 0x4, fixed_abs, tag = 'smem constant byte address 0x4 - core index']
  #allocation1 [shape = 'u32[144,128]{1,0:T(1,128)}', space=vmem, size = 0x12000, scoped, tag = 'internal scratch']
  %s0 = inlined_call_operand.hbm [shape: f32[2,16], index: 0, kind: input, shape index: {}]
  %s1 = inlined_call_operand.vmem [shape: f32[2,16], index: 1, kind: input, shape index: {}]
  %s2 = inlined_call_operand.hbm [shape: f32[2,96], index: 2, kind: output, shape index: {}]
  %s3 = sld [smem:[#allocation0]]
  $region22: #{tpu_custom_call.1} parent=0
    _
  %s5 = ssub.s32 1, %s3
  %s6 = scalar_select 0, %s5, %s3
  $region1: #{tpu_custom_call.1} parent=0
    #allocation2 [shape = 'u8[1024]{0}', space=vmem, size = 0x400, scoped, tag = 'input window, operand 0, single buffered']
    #allocation3 [shape = 's32[1]{0}', space=sflag, size = 0x4, scoped, tag = 'scoped memory for tpu_custom_call.1']
    #allocation4 [shape = 's32[1]{0}', space=sflag, size = 0x4, scoped, tag = 'scoped memory for tpu_custom_call.1']
    #allocation5 [shape = 'u8[1024]{0}', space=vmem, size = 0x400, scoped, tag = 'output window, operand 0, single buffered']
    %7 = vsyncpa [#allocation3], 0
    %8 = vsyncpa [#allocation4], 0
    // Predicated region
    $region2: #{tpu_custom_call.1} parent=1 // pred_check
      _
    $region3: #{tpu_custom_call.1} parent=1 // pred_check_branch
      %10 = sbr.rel (0) target = $region5
    $region4: #{tpu_custom_call.1} parent=1 // pred_region
      %s12 = ssub.s32 32, 32
      %13 = vsyncadd [#allocation3], %s12
      %s15 = sshll.u32 [#allocation2], 4
      %s16 = int_to_ptr.vmem [resolvable:$true] %s15
      %18 = dma.hbm_to_vmem [thread:$0]  %s0, 32, %s16, [#allocation3]
    $region5: #{tpu_custom_call.1} parent=1 // pred_fallthru
      _
    // Predicated region
    $region6: #{tpu_custom_call.1} parent=1 // pred_check
      _
    $region7: #{tpu_custom_call.1} parent=1 // pred_check_branch
      %20 = sbr.rel (0) target = $region9
    $region8: #{tpu_custom_call.1} parent=1 // pred_region
      _
    $region9: #{tpu_custom_call.1} parent=1 // pred_fallthru
      _
    // Predicated region
    $region10: #{tpu_custom_call.1} parent=1 // pred_check
      _
    $region11: #{tpu_custom_call.1} parent=1 // pred_check_branch
      %22 = sbr.rel (0) target = $region13
    $region12: #{tpu_custom_call.1} parent=1 // pred_region
      %23 = dma.done [#allocation3], 32
    $region13: #{tpu_custom_call.1} parent=1 // pred_fallthru
      _
    %v24 = vld [vmem:[#allocation2] sm:$0x3]
    %v25 = vld [vmem:[%s1] sm:$0x3]
    %v26 = vmax.f32 %v24, 0.0
    %v27 = vmax.f32 %v25, 0.0
    %v28 = vadd.f32 %v24, %v25
    %v29 = vmax.f32 %v28, 0.0
    %vm30 = vcmask 123904
    %31 = vst.msk [vmem:[#allocation5] sm:$0x3] %vm30, %v26
    %33 = vrot.lane.b32.xlu0 %v27, 16
    %v34 = vpop.permute.xlu0 %33
    %vm36 = vcmask 255104
    %37 = vst.msk [vmem:[#allocation5] sm:$0x3] %vm36, %v34
    %39 = vrot.lane.b32.xlu0 %v29, 32
    %v40 = vpop.permute.xlu0 %39
    %vm42 = vcmask 386304
    %43 = vst.msk [vmem:[#allocation5] sm:$0x3] %vm42, %v40
    %v44 = vadd.f32 %v27, %v27
    %46 = vrot.lane.b32.xlu0 %v44, 48
    %v47 = vpop.permute.xlu0 %46
    %vm49 = vcmask 517504
    %50 = vst.msk [vmem:[#allocation5] sm:$0x3] %vm49, %v47
    %51 = vrot.lane.b32.xlu0 %v27, 64
    %v52 = vpop.permute.xlu0 %51
    %vm54 = vcmask 648704
    %55 = vst.msk [vmem:[#allocation5] sm:$0x3] %vm54, %v52
    %56 = vrot.lane.b32.xlu0 %v27, 80
    %v57 = vpop.permute.xlu0 %56
    %vm59 = vcmask 779904
    %60 = vst.msk [vmem:[#allocation5] sm:$0x3] %vm59, %v57
    // Predicated region
    $region14: #{tpu_custom_call.1} parent=1 // pred_check
      _
    $region15: #{tpu_custom_call.1} parent=1 // pred_check_branch
      %62 = sbr.rel (0) target = $region17
    $region16: #{tpu_custom_call.1} parent=1 // pred_region
      %s64 = ssub.s32 32, 32
      %65 = vsyncadd [#allocation4], %s64
      %s67 = sshll.u32 [#allocation5], 4
      %s68 = int_to_ptr.vmem [resolvable:$true] %s67
      %70 = dma.vmem_to_hbm [thread:$0]  %s68, 32, %s2, [#allocation4]
    $region17: #{tpu_custom_call.1} parent=1 // pred_fallthru
      _
    // Predicated region
    $region18: #{tpu_custom_call.1} parent=1 // pred_check
      _
    $region19: #{tpu_custom_call.1} parent=1 // pred_check_branch
      %72 = sbr.rel (0) target = $region21
    $region20: #{tpu_custom_call.1} parent=1 // pred_region
      %73 = dma.done [#allocation4], 32
    $region21: #{tpu_custom_call.1} parent=1 // pred_fallthru
      _
    %74 = vsyncpa [#allocation3], 1
    %75 = vsyncpa [#allocation4], 1

</llo_original>
